<compile_context>
chip_gen: v7x
topology: tpu7x:2x2x1
jax: 0.10.0
libtpu: 0.0.40
codegen_flags: <defaults>
</compile_context>

<pallas_src>
import functools

import jax
import jax.numpy as jnp
from jax.experimental import pallas as pl
from jax.experimental.pallas import tpu as pltpu


def _init_block_kernel(t_ref, w_ref, b_ref, o_ref):
    # t_ref: (1, Kp, TILE_PIX) bf16 -- stacked 3x3/s2 taps for this pixel tile
    # w_ref: (Cp, Kp)          bf16 -- BN-scale-folded conv weights
    # b_ref: (Cp, 1)           f32  -- folded BN bias
    # o_ref: (1, Cp, TILE_PIX) out_dtype
    acc = jnp.dot(w_ref[...], t_ref[0], preferred_element_type=jnp.float32)
    y = acc + b_ref[...]
    o_ref[0] = (y * jax.nn.sigmoid(y)).astype(o_ref.dtype)   # fused SiLU


def _round_up(x, m):
    return ((x + m - 1) // m) * m


def _pick_tile_pix(n_pix, target=4096):
    """Largest multiple of 128 that divides n_pix and is <= target (else n_pix)."""
    if n_pix <= target:
        return n_pix
    t = target - (target % 128)
    while t >= 128:
        if n_pix % t == 0:
            return t
        t -= 128
    # TODO(synk): pad the pixel dim instead of falling back to one giant tile.
    return n_pix


@functools.partial(jax.jit, static_argnames=("eps", "out_dtype"))
def init_block_forward(x_nchw, conv_w, bn_gamma, bn_beta, bn_mean, bn_var,
                       *, eps=1e-3, out_dtype=jnp.bfloat16):
    N, C_in, H, W = x_nchw.shape
    C_out = conv_w.shape[0]
    assert H % 2 == 0 and W % 2 == 0, "even spatial dims expected for 3x3/s2/p1"
    assert C_out <= 128  # TODO(synk): add an output-channel grid axis for C_out > 128
    Ho, Wo = H // 2, W // 2
    n_pix = Ho * Wo

    out_isize = jnp.dtype(out_dtype).itemsize
    sub = 16 if out_isize == 2 else 8
    Cp = _round_up(C_out, sub)        # sublane-packed output-channel padding
    K = 9 * C_in
    Kp = _round_up(K, 16)             # bf16 sublane packing of contraction dim
    tile_pix = _pick_tile_pix(n_pix)

    # ---- stacked 9-tap plane (layout plumbing; read exactly once by kernel) ----
    xp = jnp.pad(x_nchw, ((0, 0), (0, 0), (1, 1), (1, 1)))       # (N, C, H+2, W+2)
    taps = jnp.concatenate(
        [xp[:, :, kh:kh + 2 * Ho:2, kw:kw + 2 * Wo:2]
         for kh in range(3) for kw in range(3)], axis=1)          # (N, 9*C_in, Ho, Wo)
    taps = taps.reshape(N, K, n_pix)
    taps = jnp.pad(taps, ((0, 0), (0, Kp - K), (0, 0))).astype(jnp.bfloat16)

    # ---- weights: OIHW -> (C_out, 9*C_in) in (kh, kw, ci) order; BN folded ----
    scale = bn_gamma / jnp.sqrt(bn_var + eps)                     # (C_out,)
    bias = bn_beta - bn_mean * scale                              # (C_out,)
    w_flat = jnp.transpose(conv_w, (0, 2, 3, 1)).reshape(C_out, K) * scale[:, None]
    w_flat = jnp.pad(w_flat, ((0, Cp - C_out), (0, Kp - K))).astype(jnp.bfloat16)
    bias_p = jnp.pad(bias, (0, Cp - C_out)).reshape(Cp, 1).astype(jnp.float32)

    # ---- derived VMEM budget (double-buffered tap/out blocks + weights +
    #      bias + f32 accumulator/SiLU intermediate), capped at 48 MiB ----
    vmem_need = (2 * (Kp * tile_pix * 2 + Cp * tile_pix * out_isize)
                 + Cp * Kp * 2 + Cp * 128 * 4 + Cp * tile_pix * 4)
    vmem_limit = int(min(max(2 * vmem_need, 16 * 2 ** 20), 48 * 2 ** 20))

    cost = pl.CostEstimate(
        flops=2 * N * Cp * Kp * n_pix,
        transcendentals=N * Cp * n_pix,
        bytes_accessed=int(N * Kp * n_pix * 2 + Cp * Kp * 2 + Cp * 4
                           + N * Cp * n_pix * out_isize))

    out = pl.pallas_call(
        _init_block_kernel,
        out_shape=jax.ShapeDtypeStruct((N, Cp, n_pix), out_dtype),
        grid=(N, n_pix // tile_pix),
        in_specs=[
            pl.BlockSpec((1, Kp, tile_pix), lambda n, j: (n, 0, j)),
            pl.BlockSpec((Cp, Kp), lambda n, j: (0, 0)),
            pl.BlockSpec((Cp, 1), lambda n, j: (0, 0)),
        ],
        out_specs=pl.BlockSpec((1, Cp, tile_pix), lambda n, j: (n, 0, j)),
        compiler_params=pltpu.CompilerParams(
            dimension_semantics=("parallel", "parallel"),
            vmem_limit_bytes=vmem_limit),
        cost_estimate=cost,
    )(taps, w_flat, bias_p)

    # Channel-major kernel output reshapes straight to NCHW.  Copy-free when
    # Cp == C_out (C_out a multiple of 16 for bf16 / 8 for f32 output).
    return out[:, :C_out, :].reshape(N, C_out, Ho, Wo)


def reference_forward(x, conv_w, gamma, beta, mean, var, *, eps=1e-3,
                      match_kernel_quantization=True):
    """Pure-JAX reference (eval-mode BN).  With match_kernel_quantization=True the
    inputs / folded weights are rounded to bf16 first, mirroring what the Pallas
    kernel feeds the MXU (accumulation stays f32), so the comparison isolates
    kernel correctness from the intentional bf16 input quantization."""
    scale = gamma / jnp.sqrt(var + eps)
    bias = beta - mean * scale
    w_eff = conv_w * scale[:, None, None, None]
    if match_kernel_quantization:
        x = x.astype(jnp.bfloat16).astype(jnp.float32)
        w_eff = w_eff.astype(jnp.bfloat16).astype(jnp.float32)
    y = jax.lax.conv_general_dilated(
        x, w_eff, window_strides=(2, 2), padding=((1, 1), (1, 1)),
        dimension_numbers=("NCHW", "OIHW", "NCHW"),
        precision=jax.lax.Precision.HIGHEST)
    y = y + bias[None, :, None, None]
    return y * jax.nn.sigmoid(y)


if __name__ == "__main__":
    key = jax.random.PRNGKey(0)
    k_x, k_w = jax.random.split(key)

    N, C_in, H, W = 2, 4, 16, 16
    C_out = 8

    x = jax.random.normal(k_x, (N, C_in, H, W), dtype=jnp.float32)
    fan_in = C_in * 3 * 3
    conv_w = (jax.random.normal(k_w, (C_out, C_in, 3, 3), dtype=jnp.float32)
              * (2.0 / fan_in) ** 0.5)

    # nn.BatchNorm2d deterministic init (eval-mode running stats)
    bn_gamma = jnp.ones((C_out,), jnp.float32)
    bn_beta = jnp.zeros((C_out,), jnp.float32)
    bn_mean = jnp.zeros((C_out,), jnp.float32)
    bn_var = jnp.ones((C_out,), jnp.float32)

    out = jax.block_until_ready(
        init_block_forward(x, conv_w, bn_gamma, bn_beta, bn_mean, bn_var))
    ref = jax.block_until_ready(
        reference_forward(x, conv_w, bn_gamma, bn_beta, bn_mean, bn_var))

    assert out.shape == (N, C_out, H // 2, W // 2), out.shape
    out_f32 = out.astype(jnp.float32)
    # 2e-2 covers bf16 input/weight quantization (mirrored in the reference);
    # the extra term covers the final bf16 rounding of the kernel's output.
    tol = 2e-2 + float(jnp.max(jnp.abs(ref))) * 2.0 ** -7
    max_err = float(jnp.max(jnp.abs(out_f32 - ref)))
    assert max_err < tol, f"max abs err {max_err} (tol {tol})"
    print("KERNEL_OK")
</pallas_src>

<mosaic_0001>
module attributes {stable_mosaic.version = 11 : i64} {
  func.func @_init_block_kernel(%arg0: i32, %arg1: i32, %arg2: memref<1x48x64xbf16, #tpu.memory_space<vmem>>, %arg3: memref<16x48xbf16, #tpu.memory_space<vmem>>, %arg4: memref<16x1xf32, #tpu.memory_space<vmem>>, %arg5: memref<1x16x64xbf16, #tpu.memory_space<vmem>>) attributes {dimension_semantics = [#tpu.dimension_semantics<parallel>, #tpu.dimension_semantics<parallel>], iteration_bounds = array<i64: 2, 1>, scalar_prefetch = 0 : i64, scratch_operands = 0 : i64, tpu.core_type = #tpu.core_type<tc>, window_params = [{transform_indices = @transform_0, window_bounds = array<i64: 1, 48, 64>}, {pipeline_mode = #tpu.pipeline_mode<synchronous>, transform_indices = @transform_1, window_bounds = array<i64: 16, 48>}, {pipeline_mode = #tpu.pipeline_mode<synchronous>, transform_indices = @transform_2, window_bounds = array<i64: 16, 1>}, {transform_indices = @transform_3, window_bounds = array<i64: 1, 16, 64>}]} {
    %c0 = arith.constant 0 : index
    %c0_0 = arith.constant 0 : index
    %0 = vector.load %arg3[%c0, %c0_0] : memref<16x48xbf16, #tpu.memory_space<vmem>>, vector<16x48xbf16>
    %c0_1 = arith.constant 0 : index
    %c0_2 = arith.constant 0 : index
    %c0_3 = arith.constant 0 : index
    %1 = vector.load %arg2[%c0_1, %c0_2, %c0_3] : memref<1x48x64xbf16, #tpu.memory_space<vmem>>, vector<1x48x64xbf16>
    %2 = vector.shape_cast %1 : vector<1x48x64xbf16> to vector<48x64xbf16>
    %cst = arith.constant dense<0.000000e+00> : vector<16x64xf32>
    %3 = tpu.matmul %0, %2, %cst {dimension_numbers = #tpu.dot_dimension_numbers<[1], [0], [0], [1], [0, 0, 1, 1], [], []>} : vector<16x48xbf16>, vector<48x64xbf16>, vector<16x64xf32> -> vector<16x64xf32>
    %c0_4 = arith.constant 0 : index
    %c0_5 = arith.constant 0 : index
    %4 = vector.load %arg4[%c0_4, %c0_5] : memref<16x1xf32, #tpu.memory_space<vmem>>, vector<16x1xf32>
    %5 = vector.broadcast %4 : vector<16x1xf32> to vector<16x64xf32>
    %6 = arith.addf %3, %5 : vector<16x64xf32>
    %7 = arith.negf %6 : vector<16x64xf32>
    %8 = math.exp %7 : vector<16x64xf32>
    %cst_6 = arith.constant 1.000000e+00 : f32
    %9 = vector.broadcast %cst_6 : f32 to vector<16x64xf32>
    %10 = arith.addf %9, %8 : vector<16x64xf32>
    %11 = arith.divf %9, %10 : vector<16x64xf32>
    %12 = arith.mulf %6, %11 : vector<16x64xf32>
    %13 = arith.truncf %12 : vector<16x64xf32> to vector<16x64xbf16>
    %c0_7 = arith.constant 0 : index
    %c0_8 = arith.constant 0 : index
    %c0_9 = arith.constant 0 : index
    %14 = vector.load %arg5[%c0_7, %c0_8, %c0_9] : memref<1x16x64xbf16, #tpu.memory_space<vmem>>, vector<1x16x64xbf16>
    %15 = vector.shape_cast %14 : vector<1x16x64xbf16> to vector<16x64xbf16>
    %16 = vector.shape_cast %13 : vector<16x64xbf16> to vector<1x16x64xbf16>
    tpu.vector_store %arg5[%c0_7, %c0_8, %c0_9], %16 {strides = array<i32>} : memref<1x16x64xbf16, #tpu.memory_space<vmem>>, vector<1x16x64xbf16>,
    return
  }
  func.func @transform_0(%arg0: i32, %arg1: i32) -> (i32, i32, i32) {
    %c0_i32 = arith.constant 0 : i32
    %c0_i32_0 = arith.constant 0 : i32
    return %arg0, %c0_i32, %arg1 : i32, i32, i32
  }
  func.func @transform_1(%arg0: i32, %arg1: i32) -> (i32, i32) {
    %c0_i32 = arith.constant 0 : i32
    %c0_i32_0 = arith.constant 0 : i32
    %c0_i32_1 = arith.constant 0 : i32
    return %c0_i32, %c0_i32_0 : i32, i32
  }
  func.func @transform_2(%arg0: i32, %arg1: i32) -> (i32, i32) {
    %c0_i32 = arith.constant 0 : i32
    %c0_i32_0 = arith.constant 0 : i32
    %c0_i32_1 = arith.constant 0 : i32
    return %c0_i32, %c0_i32_0 : i32, i32
  }
  func.func @transform_3(%arg0: i32, %arg1: i32) -> (i32, i32, i32) {
    %c0_i32 = arith.constant 0 : i32
    %c0_i32_0 = arith.constant 0 : i32
    return %arg0, %c0_i32, %arg1 : i32, i32, i32
  }
}

</mosaic_0001>

<llo_original>
// kernel: init_block_forward.1
$region0: #{init_block_forward.1}
  #allocation0 [shape = 'u32[]', space=smem, size = 0x4, offset = 0x4, fixed_abs, tag = 'smem constant byte address 0x4 - core index']
  #allocation1 [shape = 'u32[144,128]{1,0:T(1,128)}', space=vmem, size = 0x12000, scoped, tag = 'internal scratch']
  %s0 = inlined_call_operand.vmem [shape: bf16[2,48,64], index: 0, kind: input, shape index: {}]
  %s1 = inlined_call_operand.vmem [shape: bf16[16,48], index: 1, kind: input, shape index: {}]
  %s2 = inlined_call_operand.vmem [shape: f32[16,1], index: 2, kind: input, shape index: {}]
  %s3 = inlined_call_operand.vmem [shape: bf16[2,16,64], index: 3, kind: output, shape index: {}]
  %s4 = sld [smem:[#allocation0]]
  $region45: #{init_block_forward.1} parent=0
    _
  %s6 = ssub.s32 1, %s4
  %s7 = scalar_select 0, %s6, %s4
  loop: start=0, step=1, limit=4
  $region2: #{init_block_forward.1} parent=0 // loop_pre_header
    _
  $region3: #{init_block_forward.1} parent=0 // loop_header
    %s9 = sphi 0, %s13
    %p10 = scmp.ge.s32.totalorder %s9, 4
    %s16 = sphi 0, %s28
    %s17 = sphi 0, %s24
    %s18 = sphi 0, %s16
    %s19 = sphi 0, %s17
    %s20 = sphi 0, %s18
    %s21 = sphi 0, %s19
    %s33 = sphi 0, %s35
    %s36 = sphi 0, %s33
    %s37 = sphi 0, %s36
    %s53 = sphi 0, %s37
    %s57 = sphi 0, %s57
    %s59 = sphi 0, %s57
    %s60 = sphi 0, %s59
    %s74 = sphi 0, %s60
    %s78 = sphi 0, %s78
    %s80 = sphi 0, %s78
    %s81 = sphi 0, %s80
    %s95 = sphi 0, %s81
    %s103 = sphi 0, %s105
    %s106 = sphi 0, %s103
    %s107 = sphi 0, %s106
    %s123 = sphi 0, %s107
  $region4: #{init_block_forward.1} parent=0 // loop_header_branch
    %12 = sbr.rel (%p10) target = $region8
  $region5: #{init_block_forward.1} parent=0 // loop_body
    %s14 = ssub.s32 %s9, 1
    %s15 = ssub.s32 %s9, 2
    %s22 = sadd.s32 1, %s17
    %p23 = scmp.ge.s32.totalorder %s22, 1
    %s24 = scalar_select %p23, 0, %s22
    %s25 = sadd.s32 1, %s16
    %s26 = scalar_select %p23, %s25, %s16
    %p27 = scmp.ge.s32.totalorder %s26, 2
    %s28 = scalar_select %p27, 0, %s26
    %s29 = ssub.s32 %s16, %s28
    %s30 = ssub.s32 %s17, %s24
    %s31 = sor.u32 %s29, %s30
    %p32 = scmp.eq.s32.totalorder %s31, 0
    %s34 = sadd.s32 %s33, 1
    %s35 = scalar_select %p32, %s33, %s34
    %p38 = pneg %p32
    %p39 = scmp.eq.s32.totalorder %s9, 1
    %p40 = por %p38, %p39
    %p41 = scmp.ne.s32.totalorder %s33, %s36
    %p42 = scmp.eq.s32.totalorder %s9, 0
    %p43 = por %p41, %p42
    %p44 = scmp.ne.s32.totalorder %s33, %s36
    %p45 = scmp.eq.s32.totalorder %s14, 1
    %p46 = por %p44, %p45
    %p47 = scmp.ne.s32.totalorder %s36, %s37
    %p48 = scmp.eq.s32.totalorder %s14, 0
    %p49 = por %p47, %p48
    %p50 = scmp.ne.s32.totalorder %s36, %s37
    %p51 = scmp.eq.s32.totalorder %s15, 1
    %p52 = por %p50, %p51
    %p54 = scmp.ne.s32.totalorder %s37, %s53
    %p55 = scmp.eq.s32.totalorder %s15, 0
    %p56 = por %p54, %p55
    %s58 = sadd.s32 %s57, 1
    %p61 = scmp.eq.s32.totalorder %s9, 1
    %p62 = scmp.ne.s32.totalorder %s57, %s59
    %p63 = scmp.eq.s32.totalorder %s9, 0
    %p64 = por %p62, %p63
    %p65 = scmp.ne.s32.totalorder %s57, %s59
    %p66 = scmp.eq.s32.totalorder %s14, 1
    %p67 = por %p65, %p66
    %p68 = scmp.ne.s32.totalorder %s59, %s60
    %p69 = scmp.eq.s32.totalorder %s14, 0
    %p70 = por %p68, %p69
    %p71 = scmp.ne.s32.totalorder %s59, %s60
    %p72 = scmp.eq.s32.totalorder %s15, 1
    %p73 = por %p71, %p72
    %p75 = scmp.ne.s32.totalorder %s60, %s74
    %p76 = scmp.eq.s32.totalorder %s15, 0
    %p77 = por %p75, %p76
    %s79 = sadd.s32 %s78, 1
    %p82 = scmp.eq.s32.totalorder %s9, 1
    %p83 = scmp.ne.s32.totalorder %s78, %s80
    %p84 = scmp.eq.s32.totalorder %s9, 0
    %p85 = por %p83, %p84
    %p86 = scmp.ne.s32.totalorder %s78, %s80
    %p87 = scmp.eq.s32.totalorder %s14, 1
    %p88 = por %p86, %p87
    %p89 = scmp.ne.s32.totalorder %s80, %s81
    %p90 = scmp.eq.s32.totalorder %s14, 0
    %p91 = por %p89, %p90
    %p92 = scmp.ne.s32.totalorder %s80, %s81
    %p93 = scmp.eq.s32.totalorder %s15, 1
    %p94 = por %p92, %p93
    %p96 = scmp.ne.s32.totalorder %s81, %s95
    %p97 = scmp.eq.s32.totalorder %s15, 0
    %p98 = por %p96, %p97
    %s99 = ssub.s32 %s16, %s28
    %s100 = ssub.s32 %s17, %s24
    %s101 = sor.u32 %s99, %s100
    %p102 = scmp.eq.s32.totalorder %s101, 0
    %s104 = sadd.s32 %s103, 1
    %s105 = scalar_select %p102, %s103, %s104
    %p108 = pneg %p102
    %p109 = scmp.eq.s32.totalorder %s9, 1
    %p110 = por %p108, %p109
    %p111 = scmp.ne.s32.totalorder %s103, %s106
    %p112 = scmp.eq.s32.totalorder %s9, 0
    %p113 = por %p111, %p112
    %p114 = scmp.ne.s32.totalorder %s103, %s106
    %p115 = scmp.eq.s32.totalorder %s14, 1
    %p116 = por %p114, %p115
    %p117 = scmp.ne.s32.totalorder %s106, %s107
    %p118 = scmp.eq.s32.totalorder %s14, 0
    %p119 = por %p117, %p118
    %p120 = scmp.ne.s32.totalorder %s106, %s107
    %p121 = scmp.eq.s32.totalorder %s15, 1
    %p122 = por %p120, %p121
    %p124 = scmp.ne.s32.totalorder %s107, %s123
    %p125 = scmp.eq.s32.totalorder %s15, 0
    %p126 = por %p124, %p125
    %p127 = scmp.le.s32.totalorder 1, %s9
    %p128 = scmp.lt.s32.totalorder %s9, 3
    %p129 = pnand %p127, %p128
    %p130 = pneg %p129
    // Predicated region
    $region9: #{init_block_forward.1} parent=5 // pred_check
      _
    $region10: #{init_block_forward.1} parent=5 // pred_check_branch
      %132 = sbr.rel (%p129) target = $region12
    $region11: #{init_block_forward.1} parent=5 // pred_region
      %s133 = ssub.s32 %s9, 1
      // Predicated region
      $region13: #{init_block_forward.1} parent=11 // pred_check
        %p134 = pneg %p70
      $region14: #{init_block_forward.1} parent=11 // pred_check_branch
        %136 = sbr.rel (%p134) target = $region16
      $region15: #{init_block_forward.1} parent=11 // pred_region
        _
      $region16: #{init_block_forward.1} parent=11 // pred_fallthru
        _
      // Predicated region
      $region17: #{init_block_forward.1} parent=11 // pred_check
        %p137 = pneg %p91
      $region18: #{init_block_forward.1} parent=11 // pred_check_branch
        %139 = sbr.rel (%p137) target = $region20
      $region19: #{init_block_forward.1} parent=11 // pred_region
        _
      $region20: #{init_block_forward.1} parent=11 // pred_fallthru
        _
    $region12: #{init_block_forward.1} parent=5 // pred_fallthru
      _
    %p140 = scmp.lt.s32.totalorder %s9, 2
    // Predicated region
    $region21: #{init_block_forward.1} parent=5 // pred_check
      %p141 = pneg %p140
    $region22: #{init_block_forward.1} parent=5 // pred_check_branch
      %143 = sbr.rel (%p141) target = $region24
    $region23: #{init_block_forward.1} parent=5 // pred_region
      // Predicated region
      $region25: #{init_block_forward.1} parent=23 // pred_check
        %p144 = pneg %p43
      $region26: #{init_block_forward.1} parent=23 // pred_check_branch
        %146 = sbr.rel (%p144) target = $region28
      $region27: #{init_block_forward.1} parent=23 // pred_region
        %p147 = scmp.lt.s32.totalorder %s16, 1
        %s148 = scalar_select %p147, %s16, 1
        %p149 = scmp.lt.s32.totalorder %s17, 0
        %s150 = scalar_select %p149, %s17, 0
        %s151 = smul.addr %s148, 6
        %s152 = sadd.s32 %s150, %s151
        %s153 = smul.addr %s152, 4
        %s154 = scalar_lea.vmem %s0, %s153
      $region28: #{init_block_forward.1} parent=23 // pred_fallthru
        _
    $region24: #{init_block_forward.1} parent=5 // pred_fallthru
      _
    %p155 = scmp.le.s32.totalorder 1, %s9
    %p156 = scmp.lt.s32.totalorder %s9, 3
    %p157 = pnand %p155, %p156
    %p158 = pneg %p157
    // Predicated region
    $region29: #{init_block_forward.1} parent=5 // pred_check
      _
    $region30: #{init_block_forward.1} parent=5 // pred_check_branch
      %160 = sbr.rel (%p157) target = $region32
    $region31: #{init_block_forward.1} parent=5 // pred_region
      %s161 = ssub.s32 %s9, 1
      %p162 = scmp.lt.s32.totalorder %s18, 1
      %s163 = scalar_select %p162, %s18, 1
      %p164 = scmp.lt.s32.totalorder %s19, 0
      %s165 = scalar_select %p164, %s19, 0
      %s166 = smul.addr %s163, 6
      %s167 = sadd.s32 %s165, %s166
      %s168 = smul.addr %s167, 4
      %s169 = scalar_lea.vmem %s0, %s168
      %p170 = pneg %p49
      %p171 = pneg %p46
      %p172 = pneg %p70
      %p173 = pneg %p67
      %p174 = pneg %p91
      %p175 = pneg %p88
      %p176 = pneg %p119
      %p177 = pneg %p116
      %p178 = scmp.lt.s32.totalorder %s18, 1
      %s179 = scalar_select %p178, %s18, 1
      %p180 = scmp.lt.s32.totalorder %s19, 0
      %s181 = scalar_select %p180, %s19, 0
      %s182 = smul.addr %s179, 2
      %s183 = sadd.s32 %s181, %s182
      %s184 = smul.addr %s183, 4
      %s185 = scalar_lea.vmem %s3, %s184
      %p186 = scmp.lt.s32.totalorder %s18, 1
      %s187 = scalar_select %p186, %s18, 1
      %p188 = scmp.lt.s32.totalorder %s19, 0
      %s189 = scalar_select %p188, %s19, 0
      %s190 = smul.addr %s187, 6
      %s191 = sadd.s32 %s189, %s190
      %s192 = smul.addr %s191, 4
      %s193 = scalar_lea.vmem %s0, %s192
      %p194 = scmp.lt.s32.totalorder %s18, 1
      %s195 = scalar_select %p194, %s18, 1
      %p196 = scmp.lt.s32.totalorder %s19, 0
      %s197 = scalar_select %p196, %s19, 0
      %s198 = smul.addr %s195, 2
      %s199 = sadd.s32 %s197, %s198
      %s200 = smul.addr %s199, 4
      %s201 = scalar_lea.vmem %s3, %s200
      %v203 = vld [vmem:[%s1] sm:$0xf]
      %v204 = vld [vmem:[%s1 + $0x4] sm:$0xf]
      %v205 = vld [vmem:[%s193] sm:$0xf]
      %v206 = vld [vmem:[%s193 + $0x4] sm:$0xf]
      %v207 = vld [vmem:[%s193 + $0x8] sm:$0xf]
      %v208 = vld [vmem:[%s193 + $0xc] sm:$0xf]
      %v209 = vld [vmem:[%s193 + $0x10] sm:$0xf]
      %v210 = vld [vmem:[%s193 + $0x14] sm:$0xf]
      %v211 = vld [vmem:[%s2] sm:$0xff]
      %v212 = vld [vmem:[%s2 + $0x8] sm:$0xff]
      %214 = vset.pattern.permute.xlu0 0
      %215 = vperm.xlu0 %214, %v211
      %v216 = vpop.permute.xlu0 %215
      %219 = vset.pattern.permute.xlu0 0
      %220 = vperm.xlu0 %219, %v212
      %v221 = vpop.permute.xlu0 %220
      %v225 = vunpack.c.l.b16 %v203
      %v226 = vunpack.c.l.b16 %v204
      %v227 = vpack.c.b16 %v226, %v225
      %v234 = vunpack.c.l.b16 %v205
      %v235 = vunpack.c.l.b16 %v206
      %v236 = vunpack.c.l.b16 %v207
      %v237 = vunpack.c.l.b16 %v208
      %v238 = vunpack.c.l.b16 %v209
      %v239 = vunpack.c.l.b16 %v210
      %v240 = vpack.c.b16 %v235, %v234
      %v241 = vpack.c.b16 %v237, %v236
      %v242 = vpack.c.b16 %v239, %v238
      %vm246 = vcmask 392192
      %v248 = vsel %vm246, %v227, 0
      %250 = vmatprep.subr.bf16.mxu0 0
      %251 = vmatpush1.bf16.msra.mxu0 %v240
      %252 = vmatprep.subr.bf16.mxu0 0
      %253 = vmatpush1.bf16.msra.mxu0 %v241
      %254 = vmatprep.subr.bf16.mxu0 0
      %255 = vmatpush1.bf16.msra.mxu0 %v242
      %256 = vmatprep.subr.bf16.mxu0 0
      %257 = vmatpush1.bf16.msra.mxu0 0
      %258 = vmatprep.subr.bf16.mxu0 0
      %259 = vmatpush1.bf16.msra.mxu0 0
      %260 = vmatprep.subr.bf16.mxu0 0
      %261 = vmatpush1.bf16.msra.mxu0 0
      %262 = vmatprep.subr.bf16.mxu0 0
      %263 = vmatpush1.bf16.msra.mxu0 0
      %264 = vmatprep.subr.bf16.mxu0 0
      %265 = vmatpush1.bf16.msra.mxu0 0
      %266 = vmatprep.subr.bf16.mxu0 0
      %267 = vmatpush1.bf16.msra.mxu0 0
      %268 = vmatprep.subr.bf16.mxu0 0
      %269 = vmatpush1.bf16.msra.mxu0 0
      %270 = vmatprep.subr.bf16.mxu0 0
      %271 = vmatpush1.bf16.msra.mxu0 0
      %272 = vmatprep.subr.bf16.mxu0 0
      %273 = vmatpush1.bf16.msra.mxu0 0
      %274 = vmatprep.subr.bf16.mxu0 0
      %275 = vmatpush1.bf16.msra.mxu0 0
      %276 = vmatprep.subr.bf16.mxu0 0
      %277 = vmatpush1.bf16.msra.mxu0 0
      %278 = vmatprep.subr.bf16.mxu0 0
      %279 = vmatpush1.bf16.msra.mxu0 0
      %280 = vmatprep.subr.bf16.mxu0 0
      %281 = vmatpush1.bf16.msra.mxu0 0
      %282 = vmatprep.mubr.bf16.mxu0 0
      %283 = vmatmul.mubr.bf16.gmra.mrb[0].mxu0 %v248
      %v284 = vpop.f32.mrb[0].mxu0
      %v285 = vadd.f32 %v216, %v284
      %v286 = vpop.f32.mrb[0].mxu0
      %v287 = vpop.f32.mrb[0].mxu0
      %v288 = vadd.f32 %v221, %v287
      %v289 = vpop.f32.mrb[0].mxu0
      %290 = vdwg.mxu0
      %v291 = vxor.u32 %v285, 2147483648
      %v292 = vxor.u32 %v288, 2147483648
      %v293 = vmul.f32 %v291, 1.442695
      %v294 = vpow.pop %v293
      %v295 = vmul.f32 %v292, 1.442695
      %v296 = vpow.pop %v295
      %v297 = vadd.f32 %v294, 1.0
      %v298 = vadd.f32 %v296, 1.0
      %v299 = vrcp.pop %v297
      %v300 = vmul.f32 1.0, %v299
      %v301 = vrcp.pop %v298
      %v302 = vmul.f32 1.0, %v301
      %v303 = vmul.f32 %v285, %v300
      %v304 = vmul.f32 %v288, %v302
      %v305 = vpack.c.bf16 %v304, %v303
      %v307 = vunpack.c.l.b16 %v305
      %v308 = vunpack.c.h.b16 %v305
      %v309 = vpack.c.b16 %v307, %v307
      %v310 = vpack.c.b16 %v308, %v308
      %vm313 = vcmask 519168
      %314 = vst.msk [vmem:[%s201] sm:$0xf] %vm313, %v309
      %315 = vst.msk [vmem:[%s201 + $0x4] sm:$0xf] %vm313, %v310
      %p316 = scmp.lt.s32.totalorder %s18, 1
      %s317 = scalar_select %p316, %s18, 1
      %p318 = scmp.lt.s32.totalorder %s19, 0
      %s319 = scalar_select %p318, %s19, 0
      %s320 = smul.addr %s317, 2
      %s321 = sadd.s32 %s319, %s320
      %s322 = smul.addr %s321, 4
      %s323 = scalar_lea.vmem %s3, %s322
      // Predicated region
      $region33: #{init_block_forward.1} parent=31 // pred_check
        %p324 = pneg %p116
      $region34: #{init_block_forward.1} parent=31 // pred_check_branch
        %326 = sbr.rel (%p324) target = $region36
      $region35: #{init_block_forward.1} parent=31 // pred_region
        _
      $region36: #{init_block_forward.1} parent=31 // pred_fallthru
        _
    $region32: #{init_block_forward.1} parent=5 // pred_fallthru
      _
    %p327 = scmp.le.s32.totalorder 2, %s9
    // Predicated region
    $region37: #{init_block_forward.1} parent=5 // pred_check
      %p328 = pneg %p327
    $region38: #{init_block_forward.1} parent=5 // pred_check_branch
      %330 = sbr.rel (%p328) target = $region40
    $region39: #{init_block_forward.1} parent=5 // pred_region
      %s331 = ssub.s32 %s9, 2
      // Predicated region
      $region41: #{init_block_forward.1} parent=39 // pred_check
        %p332 = pneg %p122
      $region42: #{init_block_forward.1} parent=39 // pred_check_branch
        %334 = sbr.rel (%p332) target = $region44
      $region43: #{init_block_forward.1} parent=39 // pred_region
        %p335 = scmp.lt.s32.totalorder %s20, 1
        %s336 = scalar_select %p335, %s20, 1
        %p337 = scmp.lt.s32.totalorder %s21, 0
        %s338 = scalar_select %p337, %s21, 0
        %s339 = smul.addr %s336, 2
        %s340 = sadd.s32 %s338, %s339
        %s341 = smul.addr %s340, 4
        %s342 = scalar_lea.vmem %s3, %s341
      $region44: #{init_block_forward.1} parent=39 // pred_fallthru
        _
    $region40: #{init_block_forward.1} parent=5 // pred_fallthru
      _
  $region6: #{init_block_forward.1} parent=0 // loop_footer
    %s13 = sadd.s32 1, %s9
  $region7: #{init_block_forward.1} parent=0 // loop_footer_branch
    %8 = sbr.rel target = $region3
  $region8: #{init_block_forward.1} parent=0 // loop_exit
    _

</llo_original>
